<compile_context>
chip_gen: v6e
topology: v6e:2x2x1
jax: 0.10.0
libtpu: 0.0.40
codegen_flags: <defaults>
</compile_context>

<pallas_src>
import jax
import jax.numpy as jnp
from jax.experimental import pallas as pl
from jax.experimental.pallas import tpu as pltpu


def _copy_kernel(x_ref, o_ref):
    # Field already selected by the input BlockSpec's index_map: pure copy.
    o_ref[...] = x_ref[...]


def _make_select_kernel(w):
    # Fallback: block holds the paired (2*W-wide) rows; pick the half
    # statically under pl.when.  Only one branch runs per frame.
    def kernel(x_ref, o_ref):
        i = pl.program_id(0)

        @pl.when((i % 2) == 0)
        def _():
            # even frame index -> odd original rows -> right half of the pair
            o_ref[...] = x_ref[:, :, w:]

        @pl.when((i % 2) == 1)
        def _():
            # odd frame index -> even original rows -> left half of the pair
            o_ref[...] = x_ref[:, :, :w]

    return kernel


def _choose_row_tile(half_h, row_elems, itemsize, max_block_bytes=2 << 20):
    """Largest row-tile TH that divides half_h, is sublane-aligned for the
    dtype (or equals half_h), and keeps one (TH, row_elems) block under
    budget.  Falls back to half_h (full field) if nothing smaller fits."""
    sub = max(8, 32 // max(1, itemsize))   # 8 (f32) / 16 (bf16) / 32 (int8)
    row_bytes = row_elems * itemsize
    if half_h * row_bytes <= max_block_bytes:
        return half_h                       # whole field fits comfortably
    cap = max(1, max_block_bytes // row_bytes)
    best = None
    for th in range(sub, min(half_h, cap) + 1, sub):
        if half_h % th == 0:
            best = th
    return best if best is not None else half_h


def slice_pred(image):
    """image: (N, H, W).  Returns the stacked fields, shape (N, H//2, W)."""
    n, h, w = image.shape
    assert h % 2 == 0, "frame height must be even"
    half_h = h // 2
    itemsize = image.dtype.itemsize
    out_shape = jax.ShapeDtypeStruct((n, half_h, w), image.dtype)

    # Free metadata reshape: consecutive row pairs become one 2*W-wide row.
    paired = image.reshape(n, half_h, 2 * w)

    if w % 128 == 0:
        # Fast path: DMA-level field selection, kernel is a straight copy.
        th = _choose_row_tile(half_h, w, itemsize)
        return pl.pallas_call(
            _copy_kernel,
            out_shape=out_shape,
            grid_spec=pltpu.PrefetchScalarGridSpec(
                num_scalar_prefetch=0,
                grid=(n, half_h // th),
                # Block index 1 - (i % 2) along the 2*W axis selects the
                # odd-row field for even frames and the even-row field for
                # odd frames, directly in the HBM->VMEM DMA.
                in_specs=[pl.BlockSpec((1, th, w),
                                       lambda i, j: (i, j, 1 - (i % 2)))],
                out_specs=pl.BlockSpec((1, th, w), lambda i, j: (i, j, 0)),
            ),
            compiler_params=pltpu.CompilerParams(
                dimension_semantics=("parallel", "parallel")),
        )(paired)

    # Fallback (W not a multiple of 128): take the full 2*W-wide paired row
    # block (last dims equal the full array dims, so (8,128) does not apply)
    # and pick the field in-kernel under pl.when.
    th = _choose_row_tile(half_h, 2 * w, itemsize)
    return pl.pallas_call(
        _make_select_kernel(w),
        out_shape=out_shape,
        grid_spec=pltpu.PrefetchScalarGridSpec(
            num_scalar_prefetch=0,
            grid=(n, half_h // th),
            in_specs=[pl.BlockSpec((1, th, 2 * w), lambda i, j: (i, j, 0))],
            out_specs=pl.BlockSpec((1, th, w), lambda i, j: (i, j, 0)),
        ),
        compiler_params=pltpu.CompilerParams(
            dimension_semantics=("parallel", "parallel")),
    )(paired)


def slice_pred_ref(image):
    """Pure-JAX reference matching the PyTorch forward (stacked)."""
    frames = []
    for i in range(image.shape[0]):
        img = image[i]
        frames.append(img[1::2, :] if i % 2 == 0 else img[::2, :])
    return jnp.stack(frames)


if __name__ == "__main__":
    key = jax.random.PRNGKey(0)
    k1, k2 = jax.random.split(key)

    # Lane-dense frames (W multiple of 128) -> DMA-level field-select path.
    image = jax.random.normal(k1, (4, 16, 256), dtype=jnp.float32)
    out = jax.block_until_ready(slice_pred(image))
    ref = slice_pred_ref(image)
    assert out.shape == ref.shape, (out.shape, ref.shape)
    assert jnp.allclose(out, ref), "fast path mismatch vs reference"

    # Narrow frames (W not a multiple of 128) -> pl.when fallback path.
    image2 = jax.random.normal(k2, (3, 16, 16), dtype=jnp.float32)
    out2 = jax.block_until_ready(slice_pred(image2))
    ref2 = slice_pred_ref(image2)
    assert out2.shape == ref2.shape, (out2.shape, ref2.shape)
    assert jnp.allclose(out2, ref2), "fallback path mismatch vs reference"

    print("KERNEL_OK")
</pallas_src>

<mosaic_0001>
module attributes {stable_mosaic.version = 11 : i64} {
  func.func @_copy_kernel(%arg0: i32, %arg1: i32, %arg2: memref<1x8x256xf32, #tpu.memory_space<vmem>>, %arg3: memref<1x8x256xf32, #tpu.memory_space<vmem>>) attributes {dimension_semantics = [#tpu.dimension_semantics<parallel>, #tpu.dimension_semantics<parallel>], iteration_bounds = array<i64: 4, 1>, scalar_prefetch = 0 : i64, scratch_operands = 0 : i64, tpu.core_type = #tpu.core_type<tc>, window_params = [{transform_indices = @transform_0, window_bounds = array<i64: 1, 8, 256>}, {transform_indices = @transform_1, window_bounds = array<i64: 1, 8, 256>}]} {
    %c0 = arith.constant 0 : index
    %c0_0 = arith.constant 0 : index
    %c0_1 = arith.constant 0 : index
    %0 = vector.load %arg2[%c0, %c0_0, %c0_1] : memref<1x8x256xf32, #tpu.memory_space<vmem>>, vector<1x8x256xf32>
    %c0_2 = arith.constant 0 : index
    %c0_3 = arith.constant 0 : index
    %c0_4 = arith.constant 0 : index
    %1 = vector.load %arg3[%c0_2, %c0_3, %c0_4] : memref<1x8x256xf32, #tpu.memory_space<vmem>>, vector<1x8x256xf32>
    tpu.vector_store %arg3[%c0_2, %c0_3, %c0_4], %0 {strides = array<i32>} : memref<1x8x256xf32, #tpu.memory_space<vmem>>, vector<1x8x256xf32>,
    return
  }
  func.func @transform_0(%arg0: i32, %arg1: i32) -> (i32, i32, i32) {
    %c2_i32 = arith.constant 2 : i32
    %c0_i32 = arith.constant 0 : i32
    %0 = arith.cmpi eq, %c2_i32, %c0_i32 : i32
    %c1_i32 = arith.constant 1 : i32
    %1 = arith.select %0, %c1_i32, %c2_i32 : i32
    %2 = arith.remsi %arg0, %1 : i32
    %c0_i32_0 = arith.constant 0 : i32
    %3 = arith.cmpi ne, %2, %c0_i32_0 : i32
    %c0_i32_1 = arith.constant 0 : i32
    %4 = arith.cmpi slt, %2, %c0_i32_1 : i32
    %c0_i32_2 = arith.constant 0 : i32
    %5 = arith.cmpi slt, %1, %c0_i32_2 : i32
    %6 = arith.xori %4, %5 : i1
    %7 = arith.andi %6, %3 : i1
    %8 = arith.addi %2, %1 : i32
    %9 = arith.select %7, %8, %2 : i32
    %c1_i32_3 = arith.constant 1 : i32
    %10 = arith.subi %c1_i32_3, %9 : i32
    %c0_i32_4 = arith.constant 0 : i32
    return %arg0, %arg1, %10 : i32, i32, i32
  }
  func.func @transform_1(%arg0: i32, %arg1: i32) -> (i32, i32, i32) {
    %c0_i32 = arith.constant 0 : i32
    %c0_i32_0 = arith.constant 0 : i32
    return %arg0, %arg1, %c0_i32 : i32, i32, i32
  }
}

</mosaic_0001>

<llo_original>
// kernel: tpu_custom_call.1
$region0: #{tpu_custom_call.1}
  #allocation0 [shape = 'u32[]', space=smem, size = 0x4, offset = 0x4, fixed_abs, tag = 'smem constant byte address 0x4 - core index']
  #allocation1 [shape = 'u32[144,128]{1,0:T(1,128)}', space=vmem, size = 0x12000, scoped, tag = 'internal scratch']
  %s0 = inlined_call_operand.hbm [shape: f32[4,8,512], index: 0, kind: input, shape index: {}]
  %s1 = inlined_call_operand.hbm [shape: f32[4,8,256], index: 1, kind: output, shape index: {}]
  %s2 = sld [smem:[#allocation0]]
  $region41: #{tpu_custom_call.1} parent=0
    _
  %s4 = ssub.s32 1, %s2
  %s5 = scalar_select 0, %s4, %s2
  $region1: #{tpu_custom_call.1} parent=0
    #allocation2 [shape = 'u8[16384]{0}', space=vmem, size = 0x4000, scoped, tag = 'input window, operand 0']
    #allocation3 [shape = 's32[2]{0}', space=sflag, size = 0x8, scoped, tag = 'scoped memory for tpu_custom_call.1']
    #allocation4 [shape = 's32[2]{0}', space=sflag, size = 0x8, scoped, tag = 'scoped memory for tpu_custom_call.1']
    #allocation5 [shape = 'u8[16384]{0}', space=vmem, size = 0x4000, scoped, tag = 'output window, operand 0']
    %6 = vsyncpa [#allocation3], 0
    %s7 = scalar_lea.sflag [#allocation3], 1
    %8 = vsyncpa %s7, 0
    %9 = vsyncpa [#allocation4], 0
    %s10 = scalar_lea.sflag [#allocation4], 1
    %11 = vsyncpa %s10, 0
    loop: start=0, step=1, limit=6
    $region2: #{tpu_custom_call.1} parent=1 // loop_pre_header
      _
    $region3: #{tpu_custom_call.1} parent=1 // loop_header
      %s13 = sphi 0, %s17
      %p14 = scmp.ge.s32.totalorder %s13, 6
      %s20 = sphi 0, %s32
      %s21 = sphi 0, %s28
      %s22 = sphi 0, %s20
      %s23 = sphi 0, %s21
      %s24 = sphi 0, %s22
      %s25 = sphi 0, %s23
      %s65 = sphi 0, %s67
      %s68 = sphi 0, %s65
      %s69 = sphi 0, %s68
      %s85 = sphi 0, %s69
      %s93 = sphi 0, %s95
      %s96 = sphi 0, %s93
      %s97 = sphi 0, %s96
      %s113 = sphi 0, %s97
    $region4: #{tpu_custom_call.1} parent=1 // loop_header_branch
      %16 = sbr.rel (%p14) target = $region8
    $region5: #{tpu_custom_call.1} parent=1 // loop_body
      %s18 = ssub.s32 %s13, 1
      %s19 = ssub.s32 %s13, 2
      %s26 = sadd.s32 1, %s21
      %p27 = scmp.ge.s32.totalorder %s26, 1
      %s28 = scalar_select %p27, 0, %s26
      %s29 = sadd.s32 1, %s20
      %s30 = scalar_select %p27, %s29, %s20
      %p31 = scmp.ge.s32.totalorder %s30, 4
      %s32 = scalar_select %p31, 0, %s30
      %p33 = scmp.lt.s32.totalorder %s20, 0
      %s34 = ssub.s32 0, %s20
      %s35 = scalar_select %p33, %s34, %s20
      %s36 = sand.u32 %s35, 1
      %s37 = ssub.s32 0, %s36
      %s38 = scalar_select %p33, %s37, %s36
      %p39 = scmp.ne.s32.totalorder %s38, 0
      %p40 = scmp.lt.s32.totalorder %s38, 0
      %p41 = pnand %p40, %p39
      %p42 = pneg %p41
      %s43 = sadd.s32 %s38, 2
      %s44 = scalar_select %p42, %s43, %s38
      %s45 = ssub.s32 1, %s44
      %p46 = scmp.lt.s32.totalorder %s32, 0
      %s47 = ssub.s32 0, %s32
      %s48 = scalar_select %p46, %s47, %s32
      %s49 = sand.u32 %s48, 1
      %s50 = ssub.s32 0, %s49
      %s51 = scalar_select %p46, %s50, %s49
      %p52 = scmp.ne.s32.totalorder %s51, 0
      %p53 = scmp.lt.s32.totalorder %s51, 0
      %p54 = pnand %p53, %p52
      %p55 = pneg %p54
      %s56 = sadd.s32 %s51, 2
      %s57 = scalar_select %p55, %s56, %s51
      %s58 = ssub.s32 1, %s57
      %s59 = ssub.s32 %s20, %s32
      %s60 = ssub.s32 %s21, %s28
      %s61 = sor.u32 %s59, %s60
      %s62 = ssub.s32 %s45, %s58
      %s63 = sor.u32 %s61, %s62
      %p64 = scmp.eq.s32.totalorder %s63, 0
      %s66 = sadd.s32 %s65, 1
      %s67 = scalar_select %p64, %s65, %s66
      %p70 = pneg %p64
      %p71 = scmp.eq.s32.totalorder %s13, 3
      %p72 = por %p70, %p71
      %p73 = scmp.ne.s32.totalorder %s65, %s68
      %p74 = scmp.eq.s32.totalorder %s13, 0
      %p75 = por %p73, %p74
      %p76 = scmp.ne.s32.totalorder %s65, %s68
      %p77 = scmp.eq.s32.totalorder %s18, 3
      %p78 = por %p76, %p77
      %p79 = scmp.ne.s32.totalorder %s68, %s69
      %p80 = scmp.eq.s32.totalorder %s18, 0
      %p81 = por %p79, %p80
      %p82 = scmp.ne.s32.totalorder %s68, %s69
      %p83 = scmp.eq.s32.totalorder %s19, 3
      %p84 = por %p82, %p83
      %p86 = scmp.ne.s32.totalorder %s69, %s85
      %p87 = scmp.eq.s32.totalorder %s19, 0
      %p88 = por %p86, %p87
      %s89 = ssub.s32 %s20, %s32
      %s90 = ssub.s32 %s21, %s28
      %s91 = sor.u32 %s89, %s90
      %p92 = scmp.eq.s32.totalorder %s91, 0
      %s94 = sadd.s32 %s93, 1
      %s95 = scalar_select %p92, %s93, %s94
      %p98 = pneg %p92
      %p99 = scmp.eq.s32.totalorder %s13, 3
      %p100 = por %p98, %p99
      %p101 = scmp.ne.s32.totalorder %s93, %s96
      %p102 = scmp.eq.s32.totalorder %s13, 0
      %p103 = por %p101, %p102
      %p104 = scmp.ne.s32.totalorder %s93, %s96
      %p105 = scmp.eq.s32.totalorder %s18, 3
      %p106 = por %p104, %p105
      %p107 = scmp.ne.s32.totalorder %s96, %s97
      %p108 = scmp.eq.s32.totalorder %s18, 0
      %p109 = por %p107, %p108
      %p110 = scmp.ne.s32.totalorder %s96, %s97
      %p111 = scmp.eq.s32.totalorder %s19, 3
      %p112 = por %p110, %p111
      %p114 = scmp.ne.s32.totalorder %s97, %s113
      %p115 = scmp.eq.s32.totalorder %s19, 0
      %p116 = por %p114, %p115
      %p117 = scmp.le.s32.totalorder 1, %s13
      %p118 = scmp.lt.s32.totalorder %s13, 5
      %p119 = pnand %p117, %p118
      %p120 = pneg %p119
      // Predicated region
      $region9: #{tpu_custom_call.1} parent=5 // pred_check
        _
      $region10: #{tpu_custom_call.1} parent=5 // pred_check_branch
        %122 = sbr.rel (%p119) target = $region12
      $region11: #{tpu_custom_call.1} parent=5 // pred_region
        %s123 = ssub.s32 %s13, 1
      $region12: #{tpu_custom_call.1} parent=5 // pred_fallthru
        _
      %p124 = scmp.lt.s32.totalorder %s13, 4
      // Predicated region
      $region13: #{tpu_custom_call.1} parent=5 // pred_check
        %p125 = pneg %p124
      $region14: #{tpu_custom_call.1} parent=5 // pred_check_branch
        %127 = sbr.rel (%p125) target = $region16
      $region15: #{tpu_custom_call.1} parent=5 // pred_region
        // Predicated region
        $region17: #{tpu_custom_call.1} parent=15 // pred_check
          %p128 = pneg %p75
        $region18: #{tpu_custom_call.1} parent=15 // pred_check_branch
          %130 = sbr.rel (%p128) target = $region20
        $region19: #{tpu_custom_call.1} parent=15 // pred_region
          %s131 = sand.u32 %s65, 1
          %s132 = scalar_lea.sflag [#allocation3], %s131
          %s133 = sand.u32 %s65, 1
          %s134 = smul.addr %s133, 16
          %s135 = scalar_lea.vmem [#allocation2], %s134
          %p136 = scmp.lt.s32.totalorder %s20, 0
          %s137 = ssub.s32 0, %s20
          %s138 = scalar_select %p136, %s137, %s20
          %s139 = sand.u32 %s138, 1
          %s140 = ssub.s32 0, %s139
          %s141 = scalar_select %p136, %s140, %s139
          %p142 = scmp.ne.s32.totalorder %s141, 0
          %p143 = scmp.lt.s32.totalorder %s141, 0
          %p144 = pnand %p143, %p142
          %p145 = pneg %p144
          %s146 = sadd.s32 %s141, 2
          %s147 = scalar_select %p145, %s146, %s141
          %s148 = ssub.s32 1, %s147
          %s149 = smul.u32 2, %s148
          %s151 = ssub.s32 256, 256
          %152 = vsyncadd %s132, %s151
          %s153 = smul.addr %s21, 4
          %s154 = sadd.s32 %s149, %s153
          %s155 = smul.addr %s20, 4
          %s156 = sadd.s32 %s154, %s155
          %s157 = smul.addr %s156, 128
          %s158 = scalar_lea.hbm %s0, %s157
          %s160 = sshll.u32 %s135, 4
          %s161 = int_to_ptr.vmem [resolvable:$true] %s160
          %163 = dma.hbm_to_vmem [thread:$0]  %s158, 256, %s161, %s132
        $region20: #{tpu_custom_call.1} parent=15 // pred_fallthru
          _
      $region16: #{tpu_custom_call.1} parent=5 // pred_fallthru
        _
      %p164 = scmp.le.s32.totalorder 1, %s13
      %p165 = scmp.lt.s32.totalorder %s13, 5
      %p166 = pnand %p164, %p165
      %p167 = pneg %p166
      // Predicated region
      $region21: #{tpu_custom_call.1} parent=5 // pred_check
        _
      $region22: #{tpu_custom_call.1} parent=5 // pred_check_branch
        %169 = sbr.rel (%p166) target = $region24
      $region23: #{tpu_custom_call.1} parent=5 // pred_region
        %s170 = ssub.s32 %s13, 1
        %s171 = sand.u32 %s68, 1
        %s172 = scalar_lea.sflag [#allocation3], %s171
        %s173 = sand.u32 %s68, 1
        %s174 = smul.addr %s173, 16
        %s175 = scalar_lea.vmem [#allocation2], %s174
        // Predicated region
        $region25: #{tpu_custom_call.1} parent=23 // pred_check
          %p176 = pneg %p81
        $region26: #{tpu_custom_call.1} parent=23 // pred_check_branch
          %178 = sbr.rel (%p176) target = $region28
        $region27: #{tpu_custom_call.1} parent=23 // pred_region
          %179 = dma.done %s172, 256
        $region28: #{tpu_custom_call.1} parent=23 // pred_fallthru
          _
        %s180 = sand.u32 %s68, 1
        %s181 = scalar_lea.sflag [#allocation3], %s180
        %s182 = sand.u32 %s68, 1
        %s183 = smul.addr %s182, 16
        %s184 = scalar_lea.vmem [#allocation2], %s183
        %p185 = pneg %p81
        %p186 = pneg %p78
        %p187 = pneg %p109
        %p188 = pneg %p106
        %s189 = sand.u32 %s96, 1
        %s190 = scalar_lea.sflag [#allocation4], %s189
        %s191 = sand.u32 %s96, 1
        %s192 = smul.addr %s191, 16
        %s193 = scalar_lea.vmem [#allocation5], %s192
        %p194 = scmp.lt.s32.totalorder %s22, 0
        %s195 = ssub.s32 0, %s22
        %s196 = scalar_select %p194, %s195, %s22
        %s197 = sand.u32 %s196, 1
        %s198 = ssub.s32 0, %s197
        %s199 = scalar_select %p194, %s198, %s197
        %p200 = scmp.ne.s32.totalorder %s199, 0
        %p201 = scmp.lt.s32.totalorder %s199, 0
        %p202 = pnand %p201, %p200
        %p203 = pneg %p202
        %s204 = sadd.s32 %s199, 2
        %s205 = scalar_select %p203, %s204, %s199
        %s206 = ssub.s32 1, %s205
        %s207 = smul.u32 2, %s206
        %v208 = vld [vmem:[%s175] sm:$0xff]
        %v209 = vld [vmem:[%s175 + $0x8] sm:$0xff]
        %210 = vst [vmem:[%s193] sm:$0xff] %v208
        %211 = vst [vmem:[%s193 + $0x8] sm:$0xff] %v209
        %s212 = sand.u32 %s96, 1
        %s213 = scalar_lea.sflag [#allocation4], %s212
        %s214 = sand.u32 %s96, 1
        %s215 = smul.addr %s214, 16
        %s216 = scalar_lea.vmem [#allocation5], %s215
        // Predicated region
        $region29: #{tpu_custom_call.1} parent=23 // pred_check
          %p217 = pneg %p106
        $region30: #{tpu_custom_call.1} parent=23 // pred_check_branch
          %219 = sbr.rel (%p217) target = $region32
        $region31: #{tpu_custom_call.1} parent=23 // pred_region
          %s221 = ssub.s32 256, 256
          %222 = vsyncadd %s213, %s221
          %s223 = smul.addr %s23, 2
          %s224 = smul.addr %s22, 2
          %s225 = sadd.s32 %s223, %s224
          %s226 = smul.addr %s225, 128
          %s227 = scalar_lea.hbm %s1, %s226
          %s229 = sshll.u32 %s216, 4
          %s230 = int_to_ptr.vmem [resolvable:$true] %s229
          %232 = dma.vmem_to_hbm [thread:$0]  %s230, 256, %s227, %s213
        $region32: #{tpu_custom_call.1} parent=23 // pred_fallthru
          _
      $region24: #{tpu_custom_call.1} parent=5 // pred_fallthru
        _
      %p233 = scmp.le.s32.totalorder 2, %s13
      // Predicated region
      $region33: #{tpu_custom_call.1} parent=5 // pred_check
        %p234 = pneg %p233
      $region34: #{tpu_custom_call.1} parent=5 // pred_check_branch
        %236 = sbr.rel (%p234) target = $region36
      $region35: #{tpu_custom_call.1} parent=5 // pred_region
        %s237 = ssub.s32 %s13, 2
        // Predicated region
        $region37: #{tpu_custom_call.1} parent=35 // pred_check
          %p238 = pneg %p112
        $region38: #{tpu_custom_call.1} parent=35 // pred_check_branch
          %240 = sbr.rel (%p238) target = $region40
        $region39: #{tpu_custom_call.1} parent=35 // pred_region
          %s241 = sand.u32 %s97, 1
          %s242 = scalar_lea.sflag [#allocation4], %s241
          %s243 = sand.u32 %s97, 1
          %s244 = smul.addr %s243, 16
          %s245 = scalar_lea.vmem [#allocation5], %s244
          %246 = dma.done %s242, 256
        $region40: #{tpu_custom_call.1} parent=35 // pred_fallthru
          _
      $region36: #{tpu_custom_call.1} parent=5 // pred_fallthru
        _
    $region6: #{tpu_custom_call.1} parent=1 // loop_footer
      %s17 = sadd.s32 1, %s13
    $region7: #{tpu_custom_call.1} parent=1 // loop_footer_branch
      %12 = sbr.rel target = $region3
    $region8: #{tpu_custom_call.1} parent=1 // loop_exit
      _
    %247 = vsyncpa [#allocation3], 1
    %s248 = scalar_lea.sflag [#allocation3], 1
    %249 = vsyncpa %s248, 1
    %250 = vsyncpa [#allocation4], 1
    %s251 = scalar_lea.sflag [#allocation4], 1
    %252 = vsyncpa %s251, 1

</llo_original>
